<compile_context>
chip_gen: v5e
topology: v5e:2x2
jax: 0.10.0
libtpu: 0.0.40
codegen_flags: <defaults>
</compile_context>

<pallas_src>
import functools

import numpy as np

import jax
import jax.numpy as jnp
from jax import lax
from jax.experimental import pallas as pl
from jax.experimental.pallas import tpu as pltpu


def _round_up(x, m):
    return ((x + m - 1) // m) * m


def _lane_tile(hw, row_bytes, max_block_bytes=2 * 1024 * 1024):
    """Lane-axis tile: a multiple of 128, capped so one block stays small
    enough to double-buffer inside every generation's default scoped VMEM."""
    cap = max(128, (max_block_bytes // max(row_bytes, 1)) // 128 * 128)
    return int(min(cap, _round_up(hw, 128)))


# ----------------------------------------------------------------------------
# Kernel 1: pixel normalization as fused multiply-add  x*scale + shift
#           scale = 1/std, shift = -mean/std  (3 scalars per channel, host).
#           Input stays in native dtype (uint8); cast happens in-kernel.
# ----------------------------------------------------------------------------
def _normalize_kernel(img_ref, scale_ref, shift_ref, out_ref):
    # img_ref:   (N*C, T)  native dtype, spatial chunk on lanes
    # scale/shift: (N*C, 1) f32, broadcast over lanes; pure VPU mul+add
    x = img_ref[...].astype(jnp.float32)
    out_ref[...] = (x * scale_ref[...] + shift_ref[...]).astype(out_ref.dtype)


def normalize_images(images_nchw, pixel_mean, pixel_std,
                     out_dtype=jnp.float32,
                     max_block_bytes=2 * 1024 * 1024):
    n, c, h, w = images_nchw.shape
    hw = h * w
    rows = n * c
    img2d = images_nchw.reshape(rows, hw)            # native dtype, no upcast

    inv_std = 1.0 / pixel_std.astype(jnp.float32)
    scale = jnp.tile(inv_std, (n,)).reshape(rows, 1)
    shift = jnp.tile(-pixel_mean.astype(jnp.float32) * inv_std,
                     (n,)).reshape(rows, 1)

    out_itemsize = jnp.dtype(out_dtype).itemsize
    t = _lane_tile(hw, rows * out_itemsize, max_block_bytes)
    n_sp = pl.cdiv(hw, t)                            # ragged last block is OK

    out = pl.pallas_call(
        _normalize_kernel,
        out_shape=jax.ShapeDtypeStruct((rows, hw), out_dtype),
        grid=(n_sp,),
        in_specs=[
            pl.BlockSpec((rows, t), lambda j: (0, j)),
            pl.BlockSpec((rows, 1), lambda j: (0, 0)),
            pl.BlockSpec((rows, 1), lambda j: (0, 0)),
        ],
        out_specs=pl.BlockSpec((rows, t), lambda j: (0, j)),
        compiler_params=pltpu.CompilerParams(
            dimension_semantics=("parallel",)),
    )(img2d, scale, shift)
    return out.reshape(n, c, h, w)


# ----------------------------------------------------------------------------
# Kernel 2: context head (+ optional fused BCE-with-logits loss).
#   grid = (N, spatial_chunks): batch axis "parallel" (both v7x TCs),
#   spatial axis "arbitrary" (running max reduction).
# ----------------------------------------------------------------------------
def _head_kernel(feat_ref, clsw_ref, *rest, nc, hw, t, ragged, with_loss):
    if with_loss:
        mask_ref, out_ref, loss_ref, pooled_acc = rest
    else:
        out_ref, pooled_acc = rest

    j = pl.program_id(1)

    @pl.when(j == 0)
    def _():
        pooled_acc[...] = jnp.full(pooled_acc.shape, -jnp.inf,
                                   dtype=pooled_acc.dtype)

    # AdaptiveMaxPool2d((1,1)) streamed: cross-lane max of this chunk (XLU),
    # computed in the feature's native dtype (bf16), accumulated in f32.
    chunk = feat_ref[...]                                    # (1, C, T)
    if ragged:
        lane = lax.broadcasted_iota(jnp.int32, chunk.shape, 2) + j * t
        chunk = jnp.where(lane < hw, chunk,
                          jnp.array(-jnp.inf, chunk.dtype))
    chunk_max = jnp.max(chunk, axis=-1).astype(jnp.float32)  # (1, C)
    pooled_acc[...] = jnp.maximum(pooled_acc[...], chunk_max)

    @pl.when(j == pl.num_programs(1) - 1)
    def _():
        pooled = jnp.maximum(pooled_acc[...], 0.0)           # F.relu, (1, C)
        # cont_cls: Linear(C -> NC, bias=False), lane-padded to NCP.
        logits = jnp.dot(pooled, clsw_ref[...],
                         preferred_element_type=jnp.float32)  # (1, NCP)
        probs = 1.0 / (1.0 + jnp.exp(-logits))               # sigmoid (EUP)
        out_ref[:, 0, :] = logits
        out_ref[:, 1, :] = probs

        if with_loss:
            # BCEWithLogitsLoss: per-image SUM over the real NC columns only;
            # the mean over N*NC is applied outside the kernel.
            x = logits[:, :nc]
            z = mask_ref[0, :, :nc]
            per = (jnp.maximum(x, 0.0) - x * z +
                   jnp.log(1.0 + jnp.exp(-jnp.abs(x))))
            loss_ref[0, 0] = jnp.sum(per)


def context_head_and_loss(feat_nchw, cls_w, mask=None,
                          max_block_bytes=2 * 1024 * 1024):
    """feat_nchw: (N, C, H, W) native dtype (bf16/f32); cls_w: (NC, C);
    mask: (N, NC) or None.  Returns (logits, probs, loss_or_None)."""
    n, c, hf, wf = feat_nchw.shape
    nc = cls_w.shape[0]
    hw = hf * wf
    feat = feat_nchw.reshape(n, c, hw)               # no host upcast

    ncp = _round_up(nc, 128)                         # lane-dense pad
    cls_w_pad = jnp.zeros((c, ncp), jnp.float32).at[:, :nc].set(
        cls_w.T.astype(jnp.float32))

    t = _lane_tile(hw, c * jnp.dtype(feat.dtype).itemsize, max_block_bytes)
    n_sp = pl.cdiv(hw, t)
    ragged = (hw % t) != 0
    with_loss = mask is not None

    kernel = functools.partial(_head_kernel, nc=nc, hw=hw, t=t,
                               ragged=ragged, with_loss=with_loss)

    in_specs = [
        pl.BlockSpec((1, c, t), lambda i, j: (i, 0, j)),
        pl.BlockSpec((c, ncp), lambda i, j: (0, 0)),
    ]
    operands = [feat, cls_w_pad]

    head_shape = jax.ShapeDtypeStruct((n, 2, ncp), jnp.float32)
    head_spec = pl.BlockSpec((1, 2, ncp), lambda i, j: (i, 0, 0))

    if with_loss:
        mask_pad = jnp.zeros((n, 1, ncp), jnp.float32).at[:, 0, :nc].set(
            mask.astype(jnp.float32))
        in_specs.append(pl.BlockSpec((1, 1, ncp), lambda i, j: (i, 0, 0)))
        operands.append(mask_pad)
        out_shape = (head_shape, jax.ShapeDtypeStruct((n, 1), jnp.float32))
        out_specs = (head_spec,
                     pl.BlockSpec((1, 1), lambda i, j: (i, 0),
                                  memory_space=pltpu.MemorySpace.SMEM))
    else:
        out_shape = head_shape
        out_specs = head_spec

    results = pl.pallas_call(
        kernel,
        out_shape=out_shape,
        grid=(n, n_sp),
        in_specs=in_specs,
        out_specs=out_specs,
        scratch_shapes=[pltpu.VMEM((1, c), jnp.float32)],
        compiler_params=pltpu.CompilerParams(
            dimension_semantics=("parallel", "arbitrary")),
    )(*operands)

    if with_loss:
        head_out, loss_parts = results
        loss = jnp.sum(loss_parts) / float(n * nc)   # mean over all N*NC
    else:
        head_out = results
        loss = None

    logits = head_out[:, 0, :nc]
    probs = head_out[:, 1, :nc]
    return logits, probs, loss


# ----------------------------------------------------------------------------
# Wrappers mimicking context_forward_test / context_forward_train
# ----------------------------------------------------------------------------
def context_forward_test(feat_nchw, params, **kw):
    _, probs, _ = context_head_and_loss(feat_nchw, params["cls_w"], **kw)
    # filter_inds = (x > -0.01).nonzero(): sigmoid output is always > -0.01,
    # so every (image, class) pair passes; reproduce the flattened lists.
    n, nc = probs.shape
    img_cls = list(range(nc)) * n
    img_sc = [float(v) for v in np.asarray(probs).reshape(-1)]
    return img_cls, img_sc, probs


def context_forward_train(feat_nchw, gt_classes_per_image, num_classes,
                          params, **kw):
    n = feat_nchw.shape[0]
    # build the multi-hot mask on the host (no XLA scatter chain)
    mask_np = np.zeros((n, num_classes), np.float32)
    for i, gcs in enumerate(gt_classes_per_image):
        if len(gcs):
            mask_np[i, list(gcs)] = 1.0
    mask = jnp.asarray(mask_np)
    _, _, loss = context_head_and_loss(feat_nchw, params["cls_w"],
                                       mask=mask, **kw)
    return {"loss_context": loss}


# ----------------------------------------------------------------------------
if __name__ == "__main__":
    key = jax.random.PRNGKey(0)
    k_img, k_feat, k_cls = jax.random.split(key, 3)

    # small shapes: batch=2, image channels=3, image 32x32,
    # backbone feature: channels=32, spatial 20x20 (HW=400 -> exercises the
    # ragged-tile masking path), num_classes=8
    N, C_IMG, H_IMG, W_IMG = 2, 3, 32, 32
    N_F, C_FEAT, H_F, W_F = 2, 32, 20, 20
    NUM_CLASSES = 8

    # detectron2-style uint8 images, streamed to the kernel without upcasting
    images_u8 = jax.random.randint(k_img, (N, C_IMG, H_IMG, W_IMG), 0, 256,
                                   dtype=jnp.int32).astype(jnp.uint8)
    pixel_mean = jnp.array([103.530, 116.280, 123.675], jnp.float32)
    pixel_std = jnp.array([57.375, 57.120, 58.395], jnp.float32)

    # preprocess_image (normalizer) in Pallas
    images_norm = normalize_images(images_u8, pixel_mean, pixel_std,
                                   out_dtype=jnp.float32)

    # TODO(synk): backbone(images_norm) is an external detectron2 model;
    # stand in a synthetic bf16 feature map for the ROI_HEADS.IN_FEATURES level.
    feat = jax.random.normal(k_feat, (N_F, C_FEAT, H_F, W_F),
                             jnp.float32).astype(jnp.bfloat16)

    # context-head parameters (normal std=0.01); the dead 1x1 conv is removed.
    params = {
        "cls_w": 0.01 * jax.random.normal(k_cls, (NUM_CLASSES, C_FEAT),
                                          jnp.float32),
    }

    # small max_block_bytes forces multi-chunk streaming + ragged masking here
    small_blocks = dict(max_block_bytes=16 * 1024)

    # inference path (no BCE epilogue, no mask DMA)
    img_cls, img_sc, probs = context_forward_test(feat, params, **small_blocks)

    # training path (synthetic gt classes per image)
    gt_classes = [[1, 3], [0, 3, 5]]
    losses = context_forward_train(feat, gt_classes, NUM_CLASSES, params,
                                   **small_blocks)

    jax.block_until_ready(images_norm)
    jax.block_until_ready(probs)
    jax.block_until_ready(losses["loss_context"])

    # ---- sanity checks against pure-JAX references ----
    ref_norm = (images_u8.astype(jnp.float32)
                - pixel_mean.reshape(1, C_IMG, 1, 1)) / \
        pixel_std.reshape(1, C_IMG, 1, 1)
    assert jnp.allclose(images_norm, ref_norm, atol=1e-4, rtol=1e-5)

    feat_f32 = feat.astype(jnp.float32)
    pooled_ref = jnp.maximum(jnp.max(feat_f32, axis=(2, 3)), 0.0)    # (N, C)
    logits_ref = pooled_ref @ params["cls_w"].T                      # (N, NC)
    probs_ref = jax.nn.sigmoid(logits_ref)
    assert jnp.allclose(probs, probs_ref, atol=1e-5, rtol=1e-5)

    mask_ref = np.zeros((N_F, NUM_CLASSES), np.float32)
    for i, gcs in enumerate(gt_classes):
        mask_ref[i, list(gcs)] = 1.0
    x, z = logits_ref, jnp.asarray(mask_ref)
    bce_ref = jnp.mean(jnp.maximum(x, 0.0) - x * z +
                       jnp.log1p(jnp.exp(-jnp.abs(x))))
    assert jnp.allclose(losses["loss_context"], bce_ref, atol=1e-5, rtol=1e-5)

    assert images_norm.shape == (N, C_IMG, H_IMG, W_IMG)
    assert probs.shape == (N_F, NUM_CLASSES)
    assert len(img_cls) == N_F * NUM_CLASSES
    assert len(img_sc) == N_F * NUM_CLASSES

    print("KERNEL_OK")
</pallas_src>

<mosaic_0001>
module attributes {stable_mosaic.version = 11 : i64} {
  func.func @_normalize_kernel(%arg0: i32, %arg1: memref<6x1024xi8, #tpu.memory_space<vmem>>, %arg2: memref<6x1xf32, #tpu.memory_space<vmem>>, %arg3: memref<6x1xf32, #tpu.memory_space<vmem>>, %arg4: memref<6x1024xf32, #tpu.memory_space<vmem>>) attributes {dimension_semantics = [#tpu.dimension_semantics<parallel>], iteration_bounds = array<i64: 1>, scalar_prefetch = 0 : i64, scratch_operands = 0 : i64, tpu.core_type = #tpu.core_type<tc>, window_params = [{transform_indices = @transform_0, window_bounds = array<i64: 6, 1024>}, {pipeline_mode = #tpu.pipeline_mode<synchronous>, transform_indices = @transform_1, window_bounds = array<i64: 6, 1>}, {pipeline_mode = #tpu.pipeline_mode<synchronous>, transform_indices = @transform_2, window_bounds = array<i64: 6, 1>}, {transform_indices = @transform_3, window_bounds = array<i64: 6, 1024>}]} {
    %c0 = arith.constant 0 : index
    %c0_0 = arith.constant 0 : index
    %0 = vector.load %arg1[%c0, %c0_0] : memref<6x1024xi8, #tpu.memory_space<vmem>>, vector<6x1024xi8>
    %1 = arith.uitofp %0 : vector<6x1024xi8> to vector<6x1024xf32>
    %c0_1 = arith.constant 0 : index
    %c0_2 = arith.constant 0 : index
    %2 = vector.load %arg2[%c0_1, %c0_2] : memref<6x1xf32, #tpu.memory_space<vmem>>, vector<6x1xf32>
    %3 = vector.broadcast %2 : vector<6x1xf32> to vector<6x1024xf32>
    %4 = arith.mulf %1, %3 : vector<6x1024xf32>
    %c0_3 = arith.constant 0 : index
    %c0_4 = arith.constant 0 : index
    %5 = vector.load %arg3[%c0_3, %c0_4] : memref<6x1xf32, #tpu.memory_space<vmem>>, vector<6x1xf32>
    %6 = vector.broadcast %5 : vector<6x1xf32> to vector<6x1024xf32>
    %7 = arith.addf %4, %6 : vector<6x1024xf32>
    %c0_5 = arith.constant 0 : index
    %c0_6 = arith.constant 0 : index
    %8 = vector.load %arg4[%c0_5, %c0_6] : memref<6x1024xf32, #tpu.memory_space<vmem>>, vector<6x1024xf32>
    tpu.vector_store %arg4[%c0_5, %c0_6], %7 {strides = array<i32>} : memref<6x1024xf32, #tpu.memory_space<vmem>>, vector<6x1024xf32>,
    return
  }
  func.func @transform_0(%arg0: i32) -> (i32, i32) {
    %c0_i32 = arith.constant 0 : i32
    %c0_i32_0 = arith.constant 0 : i32
    return %c0_i32, %arg0 : i32, i32
  }
  func.func @transform_1(%arg0: i32) -> (i32, i32) {
    %c0_i32 = arith.constant 0 : i32
    %c0_i32_0 = arith.constant 0 : i32
    %c0_i32_1 = arith.constant 0 : i32
    return %c0_i32, %c0_i32_0 : i32, i32
  }
  func.func @transform_2(%arg0: i32) -> (i32, i32) {
    %c0_i32 = arith.constant 0 : i32
    %c0_i32_0 = arith.constant 0 : i32
    %c0_i32_1 = arith.constant 0 : i32
    return %c0_i32, %c0_i32_0 : i32, i32
  }
  func.func @transform_3(%arg0: i32) -> (i32, i32) {
    %c0_i32 = arith.constant 0 : i32
    %c0_i32_0 = arith.constant 0 : i32
    return %c0_i32, %arg0 : i32, i32
  }
}

</mosaic_0001>

<llo_original>
// kernel: tpu_custom_call.1
$region0: #{tpu_custom_call.1}
  #allocation0 [shape = 'u32[]', space=smem, size = 0x4, offset = 0x4, fixed_abs, tag = 'smem constant byte address 0x4 - core index']
  #allocation1 [shape = 'u32[72,128]{1,0:T(1,128)}', space=vmem, size = 0x9000, scoped, tag = 'internal scratch']
  %s0 = inlined_call_operand.vmem [shape: u8[6,1024], index: 0, kind: input, shape index: {}]
  %s1 = inlined_call_operand.vmem [shape: f32[6,1], index: 1, kind: input, shape index: {}]
  %s2 = inlined_call_operand.vmem [shape: f32[6,1], index: 2, kind: input, shape index: {}]
  %s3 = inlined_call_operand.hbm [shape: f32[6,1024], index: 3, kind: output, shape index: {}]
  %s4 = sld [smem:[#allocation0]]
  $region22: #{tpu_custom_call.1} parent=0
    _
  %s6 = ssub.s32 1, %s4
  %s7 = scalar_select 0, %s6, %s4
  $region1: #{tpu_custom_call.1} parent=0
    #allocation2 [shape = 'u8[32768]{0}', space=vmem, size = 0x8000, scoped, tag = 'output window, operand 0, single buffered']
    #allocation3 [shape = 's32[1]{0}', space=sflag, size = 0x4, scoped, tag = 'scoped memory for tpu_custom_call.1']
    %8 = vsyncpa [#allocation3], 0
    // Predicated region
    $region2: #{tpu_custom_call.1} parent=1 // pred_check
      _
    $region3: #{tpu_custom_call.1} parent=1 // pred_check_branch
      %10 = sbr.rel (0) target = $region5
    $region4: #{tpu_custom_call.1} parent=1 // pred_region
      _
    $region5: #{tpu_custom_call.1} parent=1 // pred_fallthru
      _
    // Predicated region
    $region6: #{tpu_custom_call.1} parent=1 // pred_check
      _
    $region7: #{tpu_custom_call.1} parent=1 // pred_check_branch
      %12 = sbr.rel (0) target = $region9
    $region8: #{tpu_custom_call.1} parent=1 // pred_region
      _
    $region9: #{tpu_custom_call.1} parent=1 // pred_fallthru
      _
    // Predicated region
    $region10: #{tpu_custom_call.1} parent=1 // pred_check
      _
    $region11: #{tpu_custom_call.1} parent=1 // pred_check_branch
      %14 = sbr.rel (0) target = $region13
    $region12: #{tpu_custom_call.1} parent=1 // pred_region
      _
    $region13: #{tpu_custom_call.1} parent=1 // pred_fallthru
      _
    %v15 = vld [vmem:[%s0] sm:$0xff]
    %v16 = vld [vmem:[%s0 + $0x8] sm:$0xff]
    %v17 = vunpack.c.0.s8 %v15
    %v18 = vunpack.c.1.s8 %v15
    %v19 = vunpack.c.2.s8 %v15
    %v20 = vunpack.c.3.s8 %v15
    %v21 = vunpack.c.0.s8 %v16
    %v22 = vunpack.c.1.s8 %v16
    %v23 = vunpack.c.2.s8 %v16
    %v24 = vunpack.c.3.s8 %v16
    %v25 = vand.u32 %v17, 255
    %v26 = vand.u32 %v18, 255
    %v27 = vand.u32 %v19, 255
    %v28 = vand.u32 %v20, 255
    %v29 = vand.u32 %v21, 255
    %v30 = vand.u32 %v22, 255
    %v31 = vand.u32 %v23, 255
    %v32 = vand.u32 %v24, 255
    %v33 = vcvt.s32.f32 %v25
    %v34 = vcvt.s32.f32 %v26
    %v35 = vcvt.s32.f32 %v27
    %v36 = vcvt.s32.f32 %v28
    %v37 = vcvt.s32.f32 %v29
    %v38 = vcvt.s32.f32 %v30
    %v39 = vcvt.s32.f32 %v31
    %v40 = vcvt.s32.f32 %v32
    %v41 = vld [vmem:[%s1] sm:$0x3f]
    %43 = vset.pattern.permute.xlu0 0
    %44 = vperm.xlu0 %43, %v41
    %v45 = vpop.permute.xlu0 %44
    %v47 = vmul.f32 %v33, %v45
    %v48 = vmul.f32 %v34, %v45
    %v49 = vmul.f32 %v35, %v45
    %v50 = vmul.f32 %v36, %v45
    %v51 = vmul.f32 %v37, %v45
    %v52 = vmul.f32 %v38, %v45
    %v53 = vmul.f32 %v39, %v45
    %v54 = vmul.f32 %v40, %v45
    %v55 = vld [vmem:[%s2] sm:$0x3f]
    %57 = vset.pattern.permute.xlu0 0
    %58 = vperm.xlu0 %57, %v55
    %v59 = vpop.permute.xlu0 %58
    %v61 = vadd.f32 %v47, %v59
    %v62 = vadd.f32 %v48, %v59
    %v63 = vadd.f32 %v49, %v59
    %v64 = vadd.f32 %v50, %v59
    %v65 = vadd.f32 %v51, %v59
    %v66 = vadd.f32 %v52, %v59
    %v67 = vadd.f32 %v53, %v59
    %v68 = vadd.f32 %v54, %v59
    %69 = vst [vmem:[#allocation2] sm:$0x3f] %v61
    %70 = vst [vmem:[#allocation2 + $0x8] sm:$0x3f] %v62
    %71 = vst [vmem:[#allocation2 + $0x10] sm:$0x3f] %v63
    %72 = vst [vmem:[#allocation2 + $0x18] sm:$0x3f] %v64
    %73 = vst [vmem:[#allocation2 + $0x20] sm:$0x3f] %v65
    %74 = vst [vmem:[#allocation2 + $0x28] sm:$0x3f] %v66
    %75 = vst [vmem:[#allocation2 + $0x30] sm:$0x3f] %v67
    %76 = vst [vmem:[#allocation2 + $0x38] sm:$0x3f] %v68
    // Predicated region
    $region14: #{tpu_custom_call.1} parent=1 // pred_check
      _
    $region15: #{tpu_custom_call.1} parent=1 // pred_check_branch
      %78 = sbr.rel (0) target = $region17
    $region16: #{tpu_custom_call.1} parent=1 // pred_region
      %80 = vsyncadd [#allocation3], 0
      %s82 = sshll.u32 [#allocation2], 4
      %s83 = int_to_ptr.vmem [resolvable:$true] %s82
      %s84 = sshll.u32 %s3, 4
      %s85 = int_to_ptr.hbm [resolvable:$true] %s84
      %87 = dma.vmem_to_hbm [thread:$0]  %s83, 1024, %s85, [#allocation3]
    $region17: #{tpu_custom_call.1} parent=1 // pred_fallthru
      _
    // Predicated region
    $region18: #{tpu_custom_call.1} parent=1 // pred_check
      _
    $region19: #{tpu_custom_call.1} parent=1 // pred_check_branch
      %89 = sbr.rel (0) target = $region21
    $region20: #{tpu_custom_call.1} parent=1 // pred_region
      %91 = dma.done [#allocation3], 1024
    $region21: #{tpu_custom_call.1} parent=1 // pred_fallthru
      _
    %92 = vsyncpa [#allocation3], 1

</llo_original>
